<compile_context>
chip_gen: v5e
topology: v5e:2x2
jax: 0.10.0
libtpu: 0.0.40
codegen_flags: <defaults>
</compile_context>

<pallas_src>
import functools
import math

import jax
import jax.numpy as jnp
from jax.experimental import pallas as pl
from jax.experimental.pallas import tpu as pltpu


def _round_up(x, m):
    return ((x + m - 1) // m) * m


def _pad_to(a, shape):
    pads = tuple((0, t - s) for s, t in zip(a.shape, shape))
    if all(p == (0, 0) for p in pads):
        return a
    return jnp.pad(a, pads)


def _vmem_cap_bytes():
    """Generation-aware scoped-VMEM ceiling (~0.75x physical); 48 MiB fallback."""
    try:
        cap = int(pltpu.get_tpu_info().vmem_capacity_bytes)
        return max(32 * 1024 * 1024, int(0.75 * cap))
    except Exception:
        return 48 * 1024 * 1024      # safe on v7x (64 MiB per TensorCore)


def _adj_block_spec(bb, tm, tk, buffers, grid_steps):
    """adj streams a new tile every grid step -> deepen its pipeline."""
    index_map = lambda b, i, k: (b, i, k)
    if buffers > 2 and grid_steps > 2:
        try:
            return pl.BlockSpec((bb, tm, tk), index_map,
                                pipeline_mode=pl.Buffered(buffers))
        except Exception:            # older BlockSpec without pipeline_mode
            pass
    return pl.BlockSpec((bb, tm, tk), index_map)


def _gcn_kernel(*refs, use_bias, x_resident, tk, use_acc):
    """out[b, i] (+)= adj[b, i, k] @ (x[b, k] @ W)  (+ bias at k == 0)."""
    x_ref, w_ref, adj_ref = refs[0], refs[1], refs[2]
    nxt = 3
    b_ref = None
    if use_bias:
        b_ref = refs[nxt]
        nxt += 1
    o_ref = refs[nxt]
    nxt += 1
    acc_ref = refs[nxt] if use_acc else None

    k = pl.program_id(2)

    if x_resident:
        # Full-contraction x panel is VMEM-resident; slice the k rows.
        start = pl.multiple_of(k * tk, tk)
        x_blk = x_ref[:, pl.ds(start, tk), :]
    else:
        x_blk = x_ref[...]

    bb, tk_rows, f_in = x_blk.shape
    # Fused phase 1: support tile for this k-slice, f32 MXU accumulation.
    s = jnp.dot(x_blk.reshape(bb * tk_rows, f_in), w_ref[...],
                preferred_element_type=jnp.float32)
    s = s.reshape(bb, tk_rows, -1).astype(adj_ref.dtype)

    # Fused phase 2: single batched contraction (no per-b Python loop).
    contrib = jnp.einsum("bmk,bkf->bmf", adj_ref[...], s,
                         preferred_element_type=jnp.float32)

    tgt = acc_ref if use_acc else o_ref

    @pl.when(k == 0)
    def _first():
        # No separate zero-init pass: the first k step writes directly.
        val = (contrib + b_ref[...]) if use_bias else contrib
        tgt[...] = val.astype(tgt.dtype)

    @pl.when(k > 0)
    def _accumulate():
        # One load + one store of the whole slab per k step.
        tgt[...] = tgt[...] + contrib.astype(tgt.dtype)

    if use_acc:
        @pl.when(k == pl.num_programs(2) - 1)
        def _writeback():
            o_ref[...] = acc_ref[...].astype(o_ref.dtype)


@functools.partial(
    jax.jit,
    static_argnames=("use_bias", "compute_dtype", "tm", "tk", "adj_buffers"))
def graph_convolution(x, adj, weight, bias=None, *, use_bias=False,
                      compute_dtype=jnp.bfloat16, tm=None, tk=None,
                      adj_buffers=3):
    """Pallas GCN layer forward: adj @ (x @ W) (+ bias), fused in one kernel.

    x:      (B, N, F_in)  float32 / bfloat16
    adj:    (B, N, N)
    weight: (F_in, F_out)
    bias:   (1, 1, F_out) or None
    compute_dtype: MXU operand dtype (bf16 recommended; accumulation is f32).
    tm, tk: output-row / contraction tile sizes (tm % 8 == 0, tk % 128 == 0).
            Defaults are generation-aware: 1024 on 128 MiB VMEM parts
            (v5e/v6e), 512 on 64 MiB parts (v7x).
    returns (B, N, F_out) with x.dtype.
    """
    B, N, F_in = x.shape
    F_out = weight.shape[1]
    out_dtype = x.dtype
    cbytes = jnp.dtype(compute_dtype).itemsize
    obytes = jnp.dtype(out_dtype).itemsize

    cap = _vmem_cap_bytes()
    if tm is None:
        tm = 1024 if cap >= 72 * 1024 * 1024 else 512
    if tk is None:
        tk = 1024 if cap >= 72 * 1024 * 1024 else 512
    assert tm % 8 == 0, "tm must be a multiple of 8"
    assert tk % 128 == 0, "tk must be a multiple of 128"

    # Lane-dense feature padding (multiples of 128).
    F_in_p = _round_up(F_in, 128)
    F_out_p = _round_up(F_out, 128)

    # dtype-native sublane packing for the second-minor (row) tile dimension.
    sub = 8 if cbytes >= 4 else (16 if cbytes == 2 else 32)

    # Output-row (tm) tiling of adj rows.
    if N <= tm:
        tm_eff = _round_up(N, sub)
        n_pad_m = tm_eff
    else:
        tm_eff = tm
        n_pad_m = _round_up(N, tm)
    # Contraction (tk) tiling; adj's lane dim -> pad to a multiple of 128.
    if N <= tk:
        tk_eff = _round_up(N, 128)
        n_pad_k = tk_eff
    else:
        tk_eff = tk
        n_pad_k = _round_up(N, tk)

    # Fuse several tiny graphs per grid step (amortize ~0.35us/step) while
    # keeping >= 2 parallel grid steps for v7x's two TensorCores.
    if N <= 128 and B > 1:
        bb = max(1, min(8, B // 2))
    else:
        bb = 1
    b_pad = _round_up(B, bb)
    num_b = b_pad // bb
    num_m = n_pad_m // tm_eff
    num_k = n_pad_k // tk_eff

    x_p = _pad_to(x, (b_pad, n_pad_k, F_in_p)).astype(compute_dtype)
    adj_p = _pad_to(adj, (b_pad, n_pad_m, n_pad_k)).astype(compute_dtype)
    w_p = _pad_to(weight, (F_in_p, F_out_p)).astype(compute_dtype)

    # Keep the full per-graph x panel VMEM-resident (one DMA per batch block)
    # when it is small vs the budget; otherwise stream per-k x tiles.
    x_panel = bb * n_pad_k * F_in_p * cbytes
    x_resident = 2 * x_panel <= cap // 4

    # f32 outputs accumulate directly in the resident output block (no scratch,
    # no final copy); only non-f32 outputs with a real k sweep need f32 scratch.
    use_acc = (num_k > 1) and (jnp.dtype(out_dtype) != jnp.dtype(jnp.float32))

    if x_resident:
        x_spec = pl.BlockSpec((bb, n_pad_k, F_in_p), lambda b, i, k: (b, 0, 0))
    else:
        x_spec = pl.BlockSpec((bb, tk_eff, F_in_p), lambda b, i, k: (b, k, 0))
    w_spec = pl.BlockSpec((F_in_p, F_out_p), lambda b, i, k: (0, 0))
    adj_spec = _adj_block_spec(bb, tm_eff, tk_eff, adj_buffers,
                               num_b * num_m * num_k)

    in_specs = [x_spec, w_spec, adj_spec]
    args = [x_p, w_p, adj_p]
    if use_bias:
        bias_p = _pad_to(bias.astype(jnp.float32), (1, 1, F_out_p))
        in_specs.append(
            pl.BlockSpec((1, 1, F_out_p), lambda b, i, k: (0, 0, 0)))
        args.append(bias_p)

    out_spec = pl.BlockSpec((bb, tm_eff, F_out_p), lambda b, i, k: (b, i, 0))
    scratch_shapes = []
    if use_acc:
        scratch_shapes.append(pltpu.VMEM((bb, tm_eff, F_out_p), jnp.float32))

    kernel = functools.partial(_gcn_kernel, use_bias=use_bias,
                               x_resident=x_resident, tk=tk_eff,
                               use_acc=use_acc)

    # Rough pipelined VMEM footprint -> explicit, generation-capped limit.
    adj_bufs = adj_buffers if adj_buffers > 2 else 2
    x_buf = 2 * (x_panel if x_resident else bb * tk_eff * F_in_p * cbytes)
    est = (x_buf
           + 2 * F_in_p * F_out_p * cbytes
           + adj_bufs * bb * tm_eff * tk_eff * cbytes
           + 2 * bb * tm_eff * F_out_p * obytes
           + (bb * tm_eff * F_out_p * 4 if use_acc else 0)
           + (2 * F_out_p * 4 if use_bias else 0)
           + bb * (tk_eff + tm_eff) * F_out_p * 4)  # in-kernel temporaries
    vmem_limit = int(min(max(2 * est, 32 * 1024 * 1024), cap))

    out_p = pl.pallas_call(
        kernel,
        out_shape=jax.ShapeDtypeStruct((b_pad, n_pad_m, F_out_p), out_dtype),
        grid_spec=pltpu.PrefetchScalarGridSpec(
            num_scalar_prefetch=0,
            grid=(num_b, num_m, num_k),
            in_specs=in_specs,
            out_specs=out_spec,
            scratch_shapes=scratch_shapes,
        ),
        compiler_params=pltpu.CompilerParams(
            dimension_semantics=("parallel", "parallel", "arbitrary"),
            vmem_limit_bytes=vmem_limit,
        ),
        cost_estimate=pl.CostEstimate(
            flops=(2 * b_pad * n_pad_k * F_in_p * F_out_p
                   + 2 * b_pad * n_pad_m * n_pad_k * F_out_p),
            transcendentals=0,
            bytes_accessed=(b_pad * n_pad_k * F_in_p * cbytes
                            + F_in_p * F_out_p * cbytes
                            + b_pad * n_pad_m * n_pad_k * cbytes
                            + b_pad * n_pad_m * F_out_p * obytes),
        ),
    )(*args)

    return out_p[:B, :N, :F_out]


def init_params(key, in_features, out_features, use_bias):
    """Deterministic init mirroring GraphConvolution.reset_parameters."""
    stdv = 1.0 / math.sqrt(out_features)
    kw, kb = jax.random.split(key)
    weight = jax.random.uniform(
        kw, (in_features, out_features), dtype=jnp.float32,
        minval=-stdv, maxval=stdv)
    bias = None
    if use_bias:
        bias = jax.random.uniform(
            kb, (1, 1, out_features), dtype=jnp.float32,
            minval=-stdv, maxval=stdv)
    return weight, bias


if __name__ == "__main__":
    key = jax.random.PRNGKey(0)
    k1, k2, k3, k4 = jax.random.split(key, 4)

    # --- module-default config: bias=False, f32 compute (tight check) -------
    B, N, F_in, F_out = 2, 16, 32, 32
    x = jax.random.normal(k1, (B, N, F_in), dtype=jnp.float32)
    adj = jax.random.uniform(k2, (B, N, N), dtype=jnp.float32)
    weight, _ = init_params(k3, F_in, F_out, use_bias=False)

    out = graph_convolution(x, adj, weight, use_bias=False,
                            compute_dtype=jnp.float32)
    out = jax.block_until_ready(out)
    ref = jnp.matmul(adj, jnp.matmul(x, weight))
    assert out.shape == (B, N, F_out)
    assert jnp.allclose(out, ref, atol=1e-4, rtol=1e-4)

    # --- bias=True path, bf16 MXU operands with f32 accumulation ------------
    weight_b, bias_b = init_params(k3, F_in, F_out, use_bias=True)
    out_b = graph_convolution(x, adj, weight_b, bias_b, use_bias=True,
                              compute_dtype=jnp.bfloat16)
    out_b = jax.block_until_ready(out_b)
    ref_b = jnp.matmul(adj, jnp.matmul(x, weight_b)) + bias_b
    assert jnp.allclose(out_b, ref_b, atol=5e-2, rtol=5e-2)

    # --- many tiny graphs: exercises batch fusion (bb > 1) ------------------
    B2 = 8
    x2 = jax.random.normal(k4, (B2, N, F_in), dtype=jnp.float32)
    adj2 = jax.random.uniform(k2, (B2, N, N), dtype=jnp.float32)
    out2 = graph_convolution(x2, adj2, weight, use_bias=False,
                             compute_dtype=jnp.float32)
    out2 = jax.block_until_ready(out2)
    ref2 = jnp.matmul(adj2, jnp.matmul(x2, weight))
    assert jnp.allclose(out2, ref2, atol=1e-4, rtol=1e-4)

    # --- larger graph: exercises row (tm) / contraction (tk) tiling ---------
    B3, N3, Fi3, Fo3 = 2, 256, 48, 40
    x3 = jax.random.normal(k1, (B3, N3, Fi3), dtype=jnp.float32)
    adj3 = jax.random.uniform(k2, (B3, N3, N3), dtype=jnp.float32)
    w3, _ = init_params(k3, Fi3, Fo3, use_bias=False)
    out3 = graph_convolution(x3, adj3, w3, use_bias=False,
                             compute_dtype=jnp.float32, tm=128, tk=128)
    out3 = jax.block_until_ready(out3)
    ref3 = jnp.matmul(adj3,
                      jnp.matmul(x3, w3, precision=jax.lax.Precision.HIGHEST),
                      precision=jax.lax.Precision.HIGHEST)
    assert out3.shape == (B3, N3, Fo3)
    assert jnp.allclose(out3, ref3, atol=1e-2, rtol=1e-3)

    # --- bf16 inputs + k sweep: exercises the f32 accumulator scratch path --
    x4 = x3.astype(jnp.bfloat16)
    adj4 = adj3.astype(jnp.bfloat16)
    out4 = graph_convolution(x4, adj4, w3, use_bias=False,
                             compute_dtype=jnp.bfloat16, tm=128, tk=128)
    out4 = jax.block_until_ready(out4)
    w3_bf = w3.astype(jnp.bfloat16).astype(jnp.float32)
    ref4 = jnp.matmul(adj4.astype(jnp.float32),
                      jnp.matmul(x4.astype(jnp.float32), w3_bf))
    assert out4.dtype == jnp.bfloat16
    assert jnp.allclose(out4.astype(jnp.float32), ref4, atol=0.5, rtol=5e-2)

    print("KERNEL_OK")
</pallas_src>

<mosaic_0001>
module attributes {stable_mosaic.version = 11 : i64} {
  func.func @_gcn_kernel(%arg0: i32, %arg1: i32, %arg2: i32, %arg3: memref<1x128x128xf32, #tpu.memory_space<vmem>>, %arg4: memref<128x128xf32, #tpu.memory_space<vmem>>, %arg5: memref<1x16x128xf32, #tpu.memory_space<vmem>>, %arg6: memref<1x16x128xf32, #tpu.memory_space<vmem>>) attributes {dimension_semantics = [#tpu.dimension_semantics<parallel>, #tpu.dimension_semantics<parallel>, #tpu.dimension_semantics<arbitrary>], iteration_bounds = array<i64: 2, 1, 1>, scalar_prefetch = 0 : i64, scratch_operands = 0 : i64, tpu.core_type = #tpu.core_type<tc>, window_params = [{transform_indices = @transform_0, window_bounds = array<i64: 1, 128, 128>}, {pipeline_mode = #tpu.pipeline_mode<synchronous>, transform_indices = @transform_1, window_bounds = array<i64: 128, 128>}, {transform_indices = @transform_2, window_bounds = array<i64: 1, 16, 128>}, {transform_indices = @transform_3, window_bounds = array<i64: 1, 16, 128>}]} {
    %c128_i32 = arith.constant 128 : i32
    %0 = arith.muli %arg2, %c128_i32 : i32
    %1 = tpu.assume_multiple %0, 128 : i32
    %c0 = arith.constant 0 : index
    %2 = arith.index_cast %1 : i32 to index
    %c0_0 = arith.constant 0 : index
    %3 = vector.load %arg3[%c0, %2, %c0_0] : memref<1x128x128xf32, #tpu.memory_space<vmem>>, vector<1x128x128xf32>
    %4 = vector.shape_cast %3 : vector<1x128x128xf32> to vector<128x128xf32>
    %c0_1 = arith.constant 0 : index
    %c0_2 = arith.constant 0 : index
    %5 = vector.load %arg4[%c0_1, %c0_2] : memref<128x128xf32, #tpu.memory_space<vmem>>, vector<128x128xf32>
    %cst = arith.constant dense<0.000000e+00> : vector<128x128xf32>
    %6 = tpu.matmul %4, %5, %cst {dimension_numbers = #tpu.dot_dimension_numbers<[1], [0], [0], [1], [0, 0, 1, 1], [], []>} : vector<128x128xf32>, vector<128x128xf32>, vector<128x128xf32> -> vector<128x128xf32>
    %7 = vector.shape_cast %6 : vector<128x128xf32> to vector<1x128x128xf32>
    %c0_3 = arith.constant 0 : index
    %c0_4 = arith.constant 0 : index
    %c0_5 = arith.constant 0 : index
    %8 = vector.load %arg5[%c0_3, %c0_4, %c0_5] : memref<1x16x128xf32, #tpu.memory_space<vmem>>, vector<1x16x128xf32>
    "tpu.trace_start"() <{level = 10 : i32, message = "bmk,bkf->bmf"}> : () -> ()
    %cst_6 = arith.constant dense<0.000000e+00> : vector<1x16x128xf32>
    %9 = tpu.matmul %8, %7, %cst_6 {dimension_numbers = #tpu.dot_dimension_numbers<[2], [1], [1], [2], [0, 0, 0, 1, 1, 2], [0], [0]>} : vector<1x16x128xf32>, vector<1x128x128xf32>, vector<1x16x128xf32> -> vector<1x16x128xf32>
    %c0_i32 = arith.constant 0 : i32
    "tpu.trace_stop"() : () -> ()
    %10 = arith.cmpi eq, %arg2, %c0_i32 : i32
    %11 = arith.extui %10 : i1 to i32
    %c0_i32_7 = arith.constant 0 : i32
    %12 = arith.cmpi ne, %11, %c0_i32_7 : i32
    scf.if %12 {
      %c0_10 = arith.constant 0 : index
      %c0_11 = arith.constant 0 : index
      %c0_12 = arith.constant 0 : index
      %16 = vector.load %arg6[%c0_10, %c0_11, %c0_12] : memref<1x16x128xf32, #tpu.memory_space<vmem>>, vector<1x16x128xf32>
      tpu.vector_store %arg6[%c0_10, %c0_11, %c0_12], %9 {strides = array<i32>} : memref<1x16x128xf32, #tpu.memory_space<vmem>>, vector<1x16x128xf32>,
    } else {
    }
    %c0_i32_8 = arith.constant 0 : i32
    %13 = arith.cmpi sgt, %arg2, %c0_i32_8 : i32
    %14 = arith.extui %13 : i1 to i32
    %c0_i32_9 = arith.constant 0 : i32
    %15 = arith.cmpi ne, %14, %c0_i32_9 : i32
    scf.if %15 {
      %c0_10 = arith.constant 0 : index
      %c0_11 = arith.constant 0 : index
      %c0_12 = arith.constant 0 : index
      %16 = vector.load %arg6[%c0_10, %c0_11, %c0_12] : memref<1x16x128xf32, #tpu.memory_space<vmem>>, vector<1x16x128xf32>
      %17 = arith.addf %16, %9 : vector<1x16x128xf32>
      %c0_13 = arith.constant 0 : index
      %c0_14 = arith.constant 0 : index
      %c0_15 = arith.constant 0 : index
      %18 = vector.load %arg6[%c0_13, %c0_14, %c0_15] : memref<1x16x128xf32, #tpu.memory_space<vmem>>, vector<1x16x128xf32>
      tpu.vector_store %arg6[%c0_13, %c0_14, %c0_15], %17 {strides = array<i32>} : memref<1x16x128xf32, #tpu.memory_space<vmem>>, vector<1x16x128xf32>,
    } else {
    }
    return
  }
  func.func @transform_0(%arg0: i32, %arg1: i32, %arg2: i32) -> (i32, i32, i32) {
    %c0_i32 = arith.constant 0 : i32
    %c0_i32_0 = arith.constant 0 : i32
    %c0_i32_1 = arith.constant 0 : i32
    return %arg0, %c0_i32, %c0_i32_0 : i32, i32, i32
  }
  func.func @transform_1(%arg0: i32, %arg1: i32, %arg2: i32) -> (i32, i32) {
    %c0_i32 = arith.constant 0 : i32
    %c0_i32_0 = arith.constant 0 : i32
    %c0_i32_1 = arith.constant 0 : i32
    return %c0_i32, %c0_i32_0 : i32, i32
  }
  func.func @transform_2(%arg0: i32, %arg1: i32, %arg2: i32) -> (i32, i32, i32) {
    %c0_i32 = arith.constant 0 : i32
    return %arg0, %arg1, %arg2 : i32, i32, i32
  }
  func.func @transform_3(%arg0: i32, %arg1: i32, %arg2: i32) -> (i32, i32, i32) {
    %c0_i32 = arith.constant 0 : i32
    %c0_i32_0 = arith.constant 0 : i32
    return %arg0, %arg1, %c0_i32 : i32, i32, i32
  }
}

</mosaic_0001>

<llo_original>
// kernel: graph_convolution.1
$region0: #{graph_convolution.1}
  #allocation0 [shape = 'u32[]', space=smem, size = 0x4, offset = 0x4, fixed_abs, tag = 'smem constant byte address 0x4 - core index']
  #allocation1 [shape = 'u32[72,128]{1,0:T(1,128)}', space=vmem, size = 0x9000, scoped, tag = 'internal scratch']
  %s0 = inlined_call_operand.vmem [shape: f32[2,128,128], index: 0, kind: input, shape index: {}]
  %s1 = inlined_call_operand.vmem [shape: f32[128,128], index: 1, kind: input, shape index: {}]
  %s2 = inlined_call_operand.vmem [shape: f32[2,16,128], index: 2, kind: input, shape index: {}]
  %s3 = inlined_call_operand.hbm [shape: f32[2,16,128], index: 3, kind: output, shape index: {}]
  %s4 = sld [smem:[#allocation0]]
  $region53: #{graph_convolution.1} parent=0
    _
  %s6 = ssub.s32 1, %s4
  %s7 = scalar_select 0, %s6, %s4
  $region1: #{graph_convolution.1} parent=0
    #allocation2 [shape = 'u8[16384]{0}', space=vmem, size = 0x4000, scoped, tag = 'output window, operand 0']
    #allocation3 [shape = 's32[2]{0}', space=sflag, size = 0x8, scoped, tag = 'scoped memory for graph_convolution.1']
    %8 = vsyncpa [#allocation3], 0
    %s9 = scalar_lea.sflag [#allocation3], 1
    %10 = vsyncpa %s9, 0
    loop: start=0, step=1, limit=4
    $region2: #{graph_convolution.1} parent=1 // loop_pre_header
      _
    $region3: #{graph_convolution.1} parent=1 // loop_header
      %s12 = sphi 0, %s16
      %p13 = scmp.ge.s32.totalorder %s12, 4
      %s19 = sphi 0, %s38
      %s20 = sphi 0, %s34
      %s21 = sphi 0, %s30
      %s22 = sphi 0, %s19
      %s23 = sphi 0, %s20
      %s24 = sphi 0, %s21
      %s25 = sphi 0, %s22
      %s26 = sphi 0, %s23
      %s27 = sphi 0, %s24
      %s41 = sphi 0, %s43
      %s44 = sphi 0, %s41
      %s45 = sphi 0, %s44
      %s61 = sphi 0, %s45
      %s65 = sphi 0, %s65
      %s67 = sphi 0, %s65
      %s68 = sphi 0, %s67
      %s82 = sphi 0, %s68
      %s92 = sphi 0, %s94
      %s95 = sphi 0, %s92
      %s96 = sphi 0, %s95
      %s112 = sphi 0, %s96
      %s120 = sphi 0, %s122
      %s123 = sphi 0, %s120
      %s124 = sphi 0, %s123
      %s140 = sphi 0, %s124
    $region4: #{graph_convolution.1} parent=1 // loop_header_branch
      %15 = sbr.rel (%p13) target = $region8
    $region5: #{graph_convolution.1} parent=1 // loop_body
      %s17 = ssub.s32 %s12, 1
      %s18 = ssub.s32 %s12, 2
      %s28 = sadd.s32 1, %s21
      %p29 = scmp.ge.s32.totalorder %s28, 1
      %s30 = scalar_select %p29, 0, %s28
      %s31 = sadd.s32 1, %s20
      %s32 = scalar_select %p29, %s31, %s20
      %p33 = scmp.ge.s32.totalorder %s32, 1
      %s34 = scalar_select %p33, 0, %s32
      %s35 = sadd.s32 1, %s19
      %s36 = scalar_select %p33, %s35, %s19
      %p37 = scmp.ge.s32.totalorder %s36, 2
      %s38 = scalar_select %p37, 0, %s36
      %s39 = ssub.s32 %s19, %s38
      %p40 = scmp.eq.s32.totalorder %s39, 0
      %s42 = sadd.s32 %s41, 1
      %s43 = scalar_select %p40, %s41, %s42
      %p46 = pneg %p40
      %p47 = scmp.eq.s32.totalorder %s12, 1
      %p48 = por %p46, %p47
      %p49 = scmp.ne.s32.totalorder %s41, %s44
      %p50 = scmp.eq.s32.totalorder %s12, 0
      %p51 = por %p49, %p50
      %p52 = scmp.ne.s32.totalorder %s41, %s44
      %p53 = scmp.eq.s32.totalorder %s17, 1
      %p54 = por %p52, %p53
      %p55 = scmp.ne.s32.totalorder %s44, %s45
      %p56 = scmp.eq.s32.totalorder %s17, 0
      %p57 = por %p55, %p56
      %p58 = scmp.ne.s32.totalorder %s44, %s45
      %p59 = scmp.eq.s32.totalorder %s18, 1
      %p60 = por %p58, %p59
      %p62 = scmp.ne.s32.totalorder %s45, %s61
      %p63 = scmp.eq.s32.totalorder %s18, 0
      %p64 = por %p62, %p63
      %s66 = sadd.s32 %s65, 1
      %p69 = scmp.eq.s32.totalorder %s12, 1
      %p70 = scmp.ne.s32.totalorder %s65, %s67
      %p71 = scmp.eq.s32.totalorder %s12, 0
      %p72 = por %p70, %p71
      %p73 = scmp.ne.s32.totalorder %s65, %s67
      %p74 = scmp.eq.s32.totalorder %s17, 1
      %p75 = por %p73, %p74
      %p76 = scmp.ne.s32.totalorder %s67, %s68
      %p77 = scmp.eq.s32.totalorder %s17, 0
      %p78 = por %p76, %p77
      %p79 = scmp.ne.s32.totalorder %s67, %s68
      %p80 = scmp.eq.s32.totalorder %s18, 1
      %p81 = por %p79, %p80
      %p83 = scmp.ne.s32.totalorder %s68, %s82
      %p84 = scmp.eq.s32.totalorder %s18, 0
      %p85 = por %p83, %p84
      %s86 = ssub.s32 %s19, %s38
      %s87 = ssub.s32 %s20, %s34
      %s88 = sor.u32 %s86, %s87
      %s89 = ssub.s32 %s21, %s30
      %s90 = sor.u32 %s88, %s89
      %p91 = scmp.eq.s32.totalorder %s90, 0
      %s93 = sadd.s32 %s92, 1
      %s94 = scalar_select %p91, %s92, %s93
      %p97 = pneg %p91
      %p98 = scmp.eq.s32.totalorder %s12, 1
      %p99 = por %p97, %p98
      %p100 = scmp.ne.s32.totalorder %s92, %s95
      %p101 = scmp.eq.s32.totalorder %s12, 0
      %p102 = por %p100, %p101
      %p103 = scmp.ne.s32.totalorder %s92, %s95
      %p104 = scmp.eq.s32.totalorder %s17, 1
      %p105 = por %p103, %p104
      %p106 = scmp.ne.s32.totalorder %s95, %s96
      %p107 = scmp.eq.s32.totalorder %s17, 0
      %p108 = por %p106, %p107
      %p109 = scmp.ne.s32.totalorder %s95, %s96
      %p110 = scmp.eq.s32.totalorder %s18, 1
      %p111 = por %p109, %p110
      %p113 = scmp.ne.s32.totalorder %s96, %s112
      %p114 = scmp.eq.s32.totalorder %s18, 0
      %p115 = por %p113, %p114
      %s116 = ssub.s32 %s19, %s38
      %s117 = ssub.s32 %s20, %s34
      %s118 = sor.u32 %s116, %s117
      %p119 = scmp.eq.s32.totalorder %s118, 0
      %s121 = sadd.s32 %s120, 1
      %s122 = scalar_select %p119, %s120, %s121
      %p125 = pneg %p119
      %p126 = scmp.eq.s32.totalorder %s12, 1
      %p127 = por %p125, %p126
      %p128 = scmp.ne.s32.totalorder %s120, %s123
      %p129 = scmp.eq.s32.totalorder %s12, 0
      %p130 = por %p128, %p129
      %p131 = scmp.ne.s32.totalorder %s120, %s123
      %p132 = scmp.eq.s32.totalorder %s17, 1
      %p133 = por %p131, %p132
      %p134 = scmp.ne.s32.totalorder %s123, %s124
      %p135 = scmp.eq.s32.totalorder %s17, 0
      %p136 = por %p134, %p135
      %p137 = scmp.ne.s32.totalorder %s123, %s124
      %p138 = scmp.eq.s32.totalorder %s18, 1
      %p139 = por %p137, %p138
      %p141 = scmp.ne.s32.totalorder %s124, %s140
      %p142 = scmp.eq.s32.totalorder %s18, 0
      %p143 = por %p141, %p142
      %p144 = scmp.le.s32.totalorder 1, %s12
      %p145 = scmp.lt.s32.totalorder %s12, 3
      %p146 = pnand %p144, %p145
      %p147 = pneg %p146
      // Predicated region
      $region9: #{graph_convolution.1} parent=5 // pred_check
        _
      $region10: #{graph_convolution.1} parent=5 // pred_check_branch
        %149 = sbr.rel (%p146) target = $region12
      $region11: #{graph_convolution.1} parent=5 // pred_region
        %s150 = ssub.s32 %s12, 1
        // Predicated region
        $region13: #{graph_convolution.1} parent=11 // pred_check
          %p151 = pneg %p78
        $region14: #{graph_convolution.1} parent=11 // pred_check_branch
          %153 = sbr.rel (%p151) target = $region16
        $region15: #{graph_convolution.1} parent=11 // pred_region
          _
        $region16: #{graph_convolution.1} parent=11 // pred_fallthru
          _
      $region12: #{graph_convolution.1} parent=5 // pred_fallthru
        _
      %p154 = scmp.lt.s32.totalorder %s12, 2
      // Predicated region
      $region17: #{graph_convolution.1} parent=5 // pred_check
        %p155 = pneg %p154
      $region18: #{graph_convolution.1} parent=5 // pred_check_branch
        %157 = sbr.rel (%p155) target = $region20
      $region19: #{graph_convolution.1} parent=5 // pred_region
        // Predicated region
        $region21: #{graph_convolution.1} parent=19 // pred_check
          %p158 = pneg %p51
        $region22: #{graph_convolution.1} parent=19 // pred_check_branch
          %160 = sbr.rel (%p158) target = $region24
        $region23: #{graph_convolution.1} parent=19 // pred_region
          %p161 = scmp.lt.s32.totalorder %s19, 1
          %s162 = scalar_select %p161, %s19, 1
          %s163 = smul.addr %s162, 16
          %s164 = smul.addr %s163, 8
          %s165 = scalar_lea.vmem %s0, %s164
        $region24: #{graph_convolution.1} parent=19 // pred_fallthru
          _
        // Predicated region
        $region25: #{graph_convolution.1} parent=19 // pred_check
          %p166 = pneg %p102
        $region26: #{graph_convolution.1} parent=19 // pred_check_branch
          %168 = sbr.rel (%p166) target = $region28
        $region27: #{graph_convolution.1} parent=19 // pred_region
          %s169 = smul.u32 2, %s20
          %p170 = scmp.lt.s32.totalorder %s19, 1
          %s171 = scalar_select %p170, %s19, 1
          %p172 = scmp.lt.s32.totalorder %s169, 1
          %s173 = scalar_select %p172, %s169, 1
          %p174 = scmp.lt.s32.totalorder %s21, 0
          %s175 = scalar_select %p174, %s21, 0
          %s176 = sadd.s32 %s175, %s173
          %s177 = smul.addr %s171, 2
          %s178 = sadd.s32 %s176, %s177
          %s179 = smul.addr %s178, 8
          %s180 = scalar_lea.vmem %s2, %s179
          %s181 = smul.u32 2, %s20
        $region28: #{graph_convolution.1} parent=19 // pred_fallthru
          _
      $region20: #{graph_convolution.1} parent=5 // pred_fallthru
        _
      %p182 = scmp.le.s32.totalorder 1, %s12
      %p183 = scmp.lt.s32.totalorder %s12, 3
      %p184 = pnand %p182, %p183
      %p185 = pneg %p184
      // Predicated region
      $region29: #{graph_convolution.1} parent=5 // pred_check
        _
      $region30: #{graph_convolution.1} parent=5 // pred_check_branch
        %187 = sbr.rel (%p184) target = $region32
      $region31: #{graph_convolution.1} parent=5 // pred_region
        %s188 = ssub.s32 %s12, 1
        %p189 = scmp.lt.s32.totalorder %s22, 1
        %s190 = scalar_select %p189, %s22, 1
        %s191 = smul.addr %s190, 16
        %s192 = smul.addr %s191, 8
        %s193 = scalar_lea.vmem %s0, %s192
        %p194 = pneg %p57
        %p195 = pneg %p54
        %p196 = pneg %p78
        %p197 = pneg %p75
        %s198 = smul.u32 2, %s23
        %p199 = scmp.lt.s32.totalorder %s22, 1
        %s200 = scalar_select %p199, %s22, 1
        %p201 = scmp.lt.s32.totalorder %s198, 1
        %s202 = scalar_select %p201, %s198, 1
        %p203 = scmp.lt.s32.totalorder %s24, 0
        %s204 = scalar_select %p203, %s24, 0
        %s205 = sadd.s32 %s204, %s202
        %s206 = smul.addr %s200, 2
        %s207 = sadd.s32 %s205, %s206
        %s208 = smul.addr %s207, 8
        %s209 = scalar_lea.vmem %s2, %s208
        %p210 = pneg %p108
        %p211 = pneg %p105
        %p212 = pneg %p136
        %p213 = pneg %p133
        %s214 = sand.u32 %s123, 1
        %s215 = scalar_lea.sflag [#allocation3], %s214
        %s216 = sand.u32 %s123, 1
        %s217 = smul.addr %s216, 16
        %s218 = scalar_lea.vmem [#allocation2], %s217
        %p219 = scmp.lt.s32.totalorder %s22, 1
        %s220 = scalar_select %p219, %s22, 1
        %s221 = smul.addr %s220, 16
        %s222 = smul.addr %s221, 8
        %s223 = scalar_lea.vmem %s0, %s222
        %s224 = smul.u32 2, %s23
        %p225 = scmp.lt.s32.totalorder %s22, 1
        %s226 = scalar_select %p225, %s22, 1
        %p227 = scmp.lt.s32.totalorder %s224, 1
        %s228 = scalar_select %p227, %s224, 1
        %p229 = scmp.lt.s32.totalorder %s24, 0
        %s230 = scalar_select %p229, %s24, 0
        %s231 = sadd.s32 %s230, %s228
        %s232 = smul.addr %s226, 2
        %s233 = sadd.s32 %s231, %s232
        %s234 = smul.addr %s233, 8
        %s235 = scalar_lea.vmem %s2, %s234
        %s236 = smul.u32 2, %s23
        %s237 = smul.u32 2, %s23
        %s238 = smul.u32 %s24, 128
        %s239 = scalar_lea.vmem %s223, %s238
        %v240 = vld [vmem:[%s239] sm:$0xff]
        %v241 = vld [vmem:[%s239 + $0x8] sm:$0xff]
        %v242 = vld [vmem:[%s239 + $0x10] sm:$0xff]
        %v243 = vld [vmem:[%s239 + $0x18] sm:$0xff]
        %v244 = vld [vmem:[%s239 + $0x20] sm:$0xff]
        %v245 = vld [vmem:[%s239 + $0x28] sm:$0xff]
        %v246 = vld [vmem:[%s239 + $0x30] sm:$0xff]
        %v247 = vld [vmem:[%s239 + $0x38] sm:$0xff]
        %v248 = vld [vmem:[%s239 + $0x40] sm:$0xff]
        %v249 = vld [vmem:[%s239 + $0x48] sm:$0xff]
        %v250 = vld [vmem:[%s239 + $0x50] sm:$0xff]
        %v251 = vld [vmem:[%s239 + $0x58] sm:$0xff]
        %v252 = vld [vmem:[%s239 + $0x60] sm:$0xff]
        %v253 = vld [vmem:[%s239 + $0x68] sm:$0xff]
        %v254 = vld [vmem:[%s239 + $0x70] sm:$0xff]
        %v255 = vld [vmem:[%s239 + $0x78] sm:$0xff]
        %v256 = vld [vmem:[%s1] sm:$0xff]
        %v257 = vld [vmem:[%s1 + $0x8] sm:$0xff]
        %v258 = vld [vmem:[%s1 + $0x10] sm:$0xff]
        %v259 = vld [vmem:[%s1 + $0x18] sm:$0xff]
        %v260 = vld [vmem:[%s1 + $0x20] sm:$0xff]
        %v261 = vld [vmem:[%s1 + $0x28] sm:$0xff]
        %v262 = vld [vmem:[%s1 + $0x30] sm:$0xff]
        %v263 = vld [vmem:[%s1 + $0x38] sm:$0xff]
        %v264 = vld [vmem:[%s1 + $0x40] sm:$0xff]
        %v265 = vld [vmem:[%s1 + $0x48] sm:$0xff]
        %v266 = vld [vmem:[%s1 + $0x50] sm:$0xff]
        %v267 = vld [vmem:[%s1 + $0x58] sm:$0xff]
        %v268 = vld [vmem:[%s1 + $0x60] sm:$0xff]
        %v269 = vld [vmem:[%s1 + $0x68] sm:$0xff]
        %v270 = vld [vmem:[%s1 + $0x70] sm:$0xff]
        %v271 = vld [vmem:[%s1 + $0x78] sm:$0xff]
        %272 = vmatpush.msra.mxu0 %v271
        %273 = vmatpush.msra.mxu0 %v270
        %274 = vmatpush.msra.mxu0 %v269
        %275 = vmatpush.msra.mxu0 %v268
        %276 = vmatpush.msra.mxu0 %v267
        %277 = vmatpush.msra.mxu0 %v266
        %278 = vmatpush.msra.mxu0 %v265
        %279 = vmatpush.msra.mxu0 %v264
        %280 = vmatpush.msra.mxu0 %v263
        %281 = vmatpush.msra.mxu0 %v262
        %282 = vmatpush.msra.mxu0 %v261
        %283 = vmatpush.msra.mxu0 %v260
        %284 = vmatpush.msra.mxu0 %v259
        %285 = vmatpush.msra.mxu0 %v258
        %286 = vmatpush.msra.mxu0 %v257
        %287 = vmatpush.msra.mxu0 %v256
        %288 = vmatmul.f32.gmra.mxu0 %v240
        %v289 = vpop.f32.mrf.mxu0
        %v290 = vadd.f32 0.0, %v289
        %291 = vmatmul.f32.gmra.mxu0 %v241
        %v292 = vpop.f32.mrf.mxu0
        %v293 = vadd.f32 0.0, %v292
        %294 = vmatmul.f32.gmra.mxu0 %v242
        %v295 = vpop.f32.mrf.mxu0
        %v296 = vadd.f32 0.0, %v295
        %297 = vmatmul.f32.gmra.mxu0 %v243
        %v298 = vpop.f32.mrf.mxu0
        %v299 = vadd.f32 0.0, %v298
        %300 = vmatmul.f32.gmra.mxu0 %v244
        %v301 = vpop.f32.mrf.mxu0
        %v302 = vadd.f32 0.0, %v301
        %303 = vmatmul.f32.gmra.mxu0 %v245
        %v304 = vpop.f32.mrf.mxu0
        %v305 = vadd.f32 0.0, %v304
        %306 = vmatmul.f32.gmra.mxu0 %v246
        %v307 = vpop.f32.mrf.mxu0
        %v308 = vadd.f32 0.0, %v307
        %309 = vmatmul.f32.gmra.mxu0 %v247
        %v310 = vpop.f32.mrf.mxu0
        %v311 = vadd.f32 0.0, %v310
        %312 = vmatmul.f32.gmra.mxu0 %v248
        %v313 = vpop.f32.mrf.mxu0
        %v314 = vadd.f32 0.0, %v313
        %315 = vmatmul.f32.gmra.mxu0 %v249
        %v316 = vpop.f32.mrf.mxu0
        %v317 = vadd.f32 0.0, %v316
        %318 = vmatmul.f32.gmra.mxu0 %v250
        %v319 = vpop.f32.mrf.mxu0
        %v320 = vadd.f32 0.0, %v319
        %321 = vmatmul.f32.gmra.mxu0 %v251
        %v322 = vpop.f32.mrf.mxu0
        %v323 = vadd.f32 0.0, %v322
        %324 = vmatmul.f32.gmra.mxu0 %v252
        %v325 = vpop.f32.mrf.mxu0
        %v326 = vadd.f32 0.0, %v325
        %327 = vmatmul.f32.gmra.mxu0 %v253
        %v328 = vpop.f32.mrf.mxu0
        %v329 = vadd.f32 0.0, %v328
        %330 = vmatmul.f32.gmra.mxu0 %v254
        %v331 = vpop.f32.mrf.mxu0
        %v332 = vadd.f32 0.0, %v331
        %333 = vmatmul.f32.gmra.mxu0 %v255
        %v334 = vpop.f32.mrf.mxu0
        %v335 = vadd.f32 0.0, %v334
        %336 = vdwg.mxu0
        %v337 = vld [vmem:[%s235] sm:$0xff]
        %v338 = vld [vmem:[%s235 + $0x8] sm:$0xff]
        %339 = vmatpush.msra.mxu0 %v335
        %340 = vmatpush.msra.mxu0 %v332
        %341 = vmatpush.msra.mxu0 %v329
        %342 = vmatpush.msra.mxu0 %v326
        %343 = vmatpush.msra.mxu0 %v323
        %344 = vmatpush.msra.mxu0 %v320
        %345 = vmatpush.msra.mxu0 %v317
        %346 = vmatpush.msra.mxu0 %v314
        %347 = vmatpush.msra.mxu0 %v311
        %348 = vmatpush.msra.mxu0 %v308
        %349 = vmatpush.msra.mxu0 %v305
        %350 = vmatpush.msra.mxu0 %v302
        %351 = vmatpush.msra.mxu0 %v299
        %352 = vmatpush.msra.mxu0 %v296
        %353 = vmatpush.msra.mxu0 %v293
        %354 = vmatpush.msra.mxu0 %v290
        %355 = vmatmul.f32.gmra.mxu0 %v337
        %v356 = vpop.f32.mrf.mxu0
        %v357 = vadd.f32 0.0, %v356
        %358 = vmatmul.f32.gmra.mxu0 %v338
        %v359 = vpop.f32.mrf.mxu0
        %v360 = vadd.f32 0.0, %v359
        %361 = vdwg.mxu0
        %p362 = scmp.eq.s32.totalorder %s24, 0
        // Predicated region
        $region33: #{graph_convolution.1} parent=31 // pred_check
          %p363 = pneg %p362
        $region34: #{graph_convolution.1} parent=31 // pred_check_branch
          %365 = sbr.rel (%p363) target = $region36
        $region35: #{graph_convolution.1} parent=31 // pred_region
          %366 = vst [vmem:[%s218] sm:$0xff] %v357
          %367 = vst [vmem:[%s218 + $0x8] sm:$0xff] %v360
        $region36: #{graph_convolution.1} parent=31 // pred_fallthru
          _
        %p368 = scmp.gt.s32.totalorder %s24, 0
        // Predicated region
        $region37: #{graph_convolution.1} parent=31 // pred_check
          %p369 = pneg %p368
        $region38: #{graph_convolution.1} parent=31 // pred_check_branch
          %371 = sbr.rel (%p369) target = $region40
        $region39: #{graph_convolution.1} parent=31 // pred_region
          %v372 = vld [vmem:[%s218] sm:$0xff]
          %v373 = vld [vmem:[%s218 + $0x8] sm:$0xff]
          %v374 = vadd.f32 %v372, %v357
          %v375 = vadd.f32 %v373, %v360
          %376 = vst [vmem:[%s218] sm:$0xff] %v374
          %377 = vst [vmem:[%s218 + $0x8] sm:$0xff] %v375
        $region40: #{graph_convolution.1} parent=31 // pred_fallthru
          _
        %s378 = sand.u32 %s123, 1
        %s379 = scalar_lea.sflag [#allocation3], %s378
        %s380 = sand.u32 %s123, 1
        %s381 = smul.addr %s380, 16
        %s382 = scalar_lea.vmem [#allocation2], %s381
        // Predicated region
        $region41: #{graph_convolution.1} parent=31 // pred_check
          %p383 = pneg %p133
        $region42: #{graph_convolution.1} parent=31 // pred_check_branch
          %385 = sbr.rel (%p383) target = $region44
        $region43: #{graph_convolution.1} parent=31 // pred_region
          %s386 = smul.u32 2, %s23
          %388 = vsyncadd %s379, 0
          %s389 = smul.addr %s22, 2
          %s390 = sadd.s32 %s386, %s389
          %s391 = smul.addr %s390, 8
          %s392 = scalar_lea.hbm %s3, %s391
          %s393 = sshll.u32 %s382, 4
          %s394 = int_to_ptr.vmem [resolvable:$true] %s393
          %s395 = sshll.u32 %s392, 4
          %s396 = int_to_ptr.hbm [resolvable:$true] %s395
          %401 = dma.vmem_to_hbm [thread:$0]  %s394, 256, %s396, %s379, 128, 128, 8
        $region44: #{graph_convolution.1} parent=31 // pred_fallthru
          _
      $region32: #{graph_convolution.1} parent=5 // pred_fallthru
        _
      %p402 = scmp.le.s32.totalorder 2, %s12
      // Predicated region
      $region45: #{graph_convolution.1} parent=5 // pred_check
        %p403 = pneg %p402
      $region46: #{graph_convolution.1} parent=5 // pred_check_branch
        %405 = sbr.rel (%p403) target = $region48
      $region47: #{graph_convolution.1} parent=5 // pred_region
        %s406 = ssub.s32 %s12, 2
        // Predicated region
        $region49: #{graph_convolution.1} parent=47 // pred_check
          %p407 = pneg %p139
        $region50: #{graph_convolution.1} parent=47 // pred_check_branch
          %409 = sbr.rel (%p407) target = $region52
        $region51: #{graph_convolution.1} parent=47 // pred_region
          %s410 = sand.u32 %s124, 1
          %s411 = scalar_lea.sflag [#allocation3], %s410
          %s412 = sand.u32 %s124, 1
          %s413 = smul.addr %s412, 16
          %s414 = scalar_lea.vmem [#allocation2], %s413
          %416 = dma.done %s411, 256
        $region52: #{graph_convolution.1} parent=47 // pred_fallthru
          _
      $region48: #{graph_convolution.1} parent=5 // pred_fallthru
        _
    $region6: #{graph_convolution.1} parent=1 // loop_footer
      %s16 = sadd.s32 1, %s12
    $region7: #{graph_convolution.1} parent=1 // loop_footer_branch
      %11 = sbr.rel target = $region3
    $region8: #{graph_convolution.1} parent=1 // loop_exit
      _
    %417 = vsyncpa [#allocation3], 1
    %s418 = scalar_lea.sflag [#allocation3], 1
    %419 = vsyncpa %s418, 1

</llo_original>
